<compile_context>
chip_gen: v5e
topology: v5e:2x2
jax: 0.10.0
libtpu: 0.0.40
codegen_flags: <defaults>
</compile_context>

<pallas_src>
import numpy as np
import jax
import jax.numpy as jnp
from jax.experimental import pallas as pl
from jax.experimental.pallas import tpu as pltpu

KERNEL = 5
PAD = KERNEL - 1              # 4
HALO_BLK = 128                # lane-aligned width of the halo / head views

SMALL_PROBLEM_BYTES = 1 << 20        # whole problem below this -> single-step full-row path
TARGET_TILE_BYTES = 4 << 20          # ~4 MiB xc tile (85%+ of HBM roofline, safe on v7x)
FALLBACK_TILE_BYTES = 4 << 20        # per-row-block budget of the full-row path
VMEM_LIMIT_BYTES = 40 << 20          # < v7x's 64 MiB physical, > v5e's 16 MiB default scoped


def _cost(n, l, l_out, bl=None):
    halo_bytes = 0 if bl is None else 4 * n * l * HALO_BLK // max(bl, 1)
    return pl.CostEstimate(
        flops=2 * KERNEL * n * l_out,
        transcendentals=0,
        bytes_accessed=4 * (n * l + n * l_out + KERNEL) + halo_bytes,
    )


# ----------------------------------------------------------------------------
# Tiled path: L % 128 == 0, grid = (ceil(N/bn), L/bl + 1)
# ----------------------------------------------------------------------------
def _conv1d_circ_tiled_kernel(w_ref, xh_ref, xg_ref, xc_ref, o_ref):
    """One (bn, bl) output tile.

    w_ref : (KERNEL,)      f32 SMEM  conv taps
    xh_ref: (bn, 128)      f32 VMEM  x block ending where this tile's window starts
                                     (its last 4 columns are the circular left halo)
    xg_ref: (bn, 128)      f32 VMEM  first 128 columns of x (only used by the tail step)
    xc_ref: (bn, bl)       f32 VMEM  x block aligned with this output tile
    o_ref : (bn, bl)       f32 VMEM  output tile (tail step: only 4 columns in-bounds)
    """
    j = pl.program_id(1)
    last = pl.num_programs(1) - 1
    taps = [w_ref[k] for k in range(KERNEL)]          # 5 SMEM scalar reads per tile

    def _edge(first4):
        # out[:, c0 + t], t in [0,4): needs x[c0-4 : c0+4] = halo_last4 ++ first4
        win = jnp.concatenate([xh_ref[:, HALO_BLK - PAD:], first4], axis=1)   # (bn, 8)
        corr = taps[0] * win[:, 0:PAD]
        for k in range(1, KERNEL):
            corr = corr + taps[k] * win[:, k:k + PAD]
        return corr

    @pl.when(j < last)
    def _main():
        xc = xc_ref[...]
        # tap k needs x shifted right by (4-k); pltpu.roll == jnp.roll semantics.
        acc = taps[PAD] * xc
        for k in range(PAD):
            acc = acc + taps[k] * pltpu.roll(xc, PAD - k, axis=1)
        o_ref[...] = acc.astype(o_ref.dtype)
        # The rolls wrapped inside the tile for lanes < 4; overwrite them from the halo.
        o_ref[:, :PAD] = _edge(xc[:, :PAD]).astype(o_ref.dtype)

    @pl.when(j == last)
    def _tail():
        # Tail step: only columns [L, L+4) are in-bounds and out[L+t] == out[t].
        o_ref[:, :PAD] = _edge(xg_ref[:, :PAD]).astype(o_ref.dtype)


def _choose_block_l(l):
    for cand in (4096, 2048, 1024, 512, 256, 128):
        if l % cand == 0:
            return cand
    return None


def _choose_block_n(n, bl):
    if n < 8:
        return n
    rows = TARGET_TILE_BYTES // (4 * bl)
    rows = max(8, (rows // 8) * 8)
    rows = min(rows, 1024)
    if n >= 16:
        # keep >= 2 blocks along N so v7x's two TensorCores both get work
        rows = min(rows, max(8, ((n // 2) // 8) * 8))
    return min(rows, (n // 8) * 8)


def _filter_tiled(w, x2, n, l, l_out, bl):
    bn = _choose_block_n(n, bl)
    m = bl // HALO_BLK            # 128-wide halo blocks per bl-wide block
    nlb = l // bl                 # bl-wide blocks covering x
    nhb = l // HALO_BLK           # 128-wide blocks covering x
    grid = (pl.cdiv(n, bn), nlb + 1)     # last L step only writes the 4 wrap columns

    return pl.pallas_call(
        _conv1d_circ_tiled_kernel,
        out_shape=jax.ShapeDtypeStruct((n, l_out), jnp.float32),
        grid=grid,
        in_specs=[
            pl.BlockSpec(memory_space=pltpu.SMEM),                                   # taps
            pl.BlockSpec((bn, HALO_BLK), lambda i, j: (i, (j * m + nhb - 1) % nhb)),  # left halo
            pl.BlockSpec((bn, HALO_BLK), lambda i, j: (i, 0)),                        # head (tail wrap)
            pl.BlockSpec((bn, bl), lambda i, j: (i, jnp.minimum(j, nlb - 1))),        # current tile
        ],
        out_specs=pl.BlockSpec((bn, bl), lambda i, j: (i, j)),
        compiler_params=pltpu.CompilerParams(
            dimension_semantics=("parallel", "parallel"),
            vmem_limit_bytes=VMEM_LIMIT_BYTES),
        cost_estimate=_cost(n, l, l_out, bl),
    )(w, x2, x2, x2)


# ----------------------------------------------------------------------------
# Full-row path: small problems and L not a multiple of 128
# ----------------------------------------------------------------------------
def _conv1d_circ_full_kernel(w_ref, x_ref, o_ref):
    x = x_ref[...]
    l = x.shape[1]
    l_out = o_ref.shape[1]                                            # l + PAD
    xw = jnp.concatenate([x[:, l - PAD:], x, x[:, :PAD]], axis=1)     # (bn, l + 2*PAD)
    taps = [w_ref[k] for k in range(KERNEL)]
    acc = taps[0] * xw[:, 0:l_out]
    for k in range(1, KERNEL):
        acc = acc + taps[k] * xw[:, k:k + l_out]
    o_ref[...] = acc.astype(o_ref.dtype)


def _filter_fallback(w, x2, n, l, l_out):
    if n < 8:
        bn = n
    else:
        budget_rows = max(8, ((FALLBACK_TILE_BYTES // (4 * (2 * l + PAD))) // 8) * 8)
        bn = min(budget_rows, (n // 8) * 8)
    grid = (pl.cdiv(n, bn),)
    return pl.pallas_call(
        _conv1d_circ_full_kernel,
        out_shape=jax.ShapeDtypeStruct((n, l_out), jnp.float32),
        grid=grid,
        in_specs=[
            pl.BlockSpec(memory_space=pltpu.SMEM),
            pl.BlockSpec((bn, l), lambda i: (i, 0)),
        ],
        out_specs=pl.BlockSpec((bn, l_out), lambda i: (i, 0)),
        compiler_params=pltpu.CompilerParams(
            dimension_semantics=("parallel",),
            vmem_limit_bytes=VMEM_LIMIT_BYTES),
        cost_estimate=_cost(n, l, l_out),
    )(w, x2)


# ----------------------------------------------------------------------------
# Public wrapper
# ----------------------------------------------------------------------------
def filter_forward(x, weight):
    """Forward pass of `Filter`.

    x      : (N, 1, L)       float
    weight : (1, 1, KERNEL)  float  (PyTorch Conv1d weight layout)
    returns: (N, 1, L + 4)   float32
    """
    n, c, l = x.shape
    assert c == 1, "Filter has a single input channel"
    assert l >= PAD, "circular padding of width 4 requires L >= 4 (PyTorch requirement too)"
    x2 = x.reshape(n, l).astype(jnp.float32)
    w = weight.reshape(KERNEL).astype(jnp.float32)
    l_out = l + KERNEL - 1

    bl = _choose_block_l(l)
    small = n * l_out * 4 <= SMALL_PROBLEM_BYTES
    if bl is None or small:
        out2d = _filter_fallback(w, x2, n, l, l_out)
    else:
        out2d = _filter_tiled(w, x2, n, l, l_out, bl)
    return out2d.reshape(n, 1, l_out)


# ----------------------------------------------------------------------------
# Reference + self-test
# ----------------------------------------------------------------------------
def _reference(x, weight):
    """Numpy reference of Conv1d(1,1,5,bias=False,padding=4,padding_mode='circular')."""
    x = np.asarray(x)
    w = np.asarray(weight).reshape(KERNEL)
    n, _, l = x.shape
    xp = np.concatenate([x[:, 0, l - PAD:], x[:, 0, :], x[:, 0, :PAD]], axis=1)
    l_out = l + KERNEL - 1
    out = np.zeros((n, 1, l_out), np.float32)
    for k in range(KERNEL):
        out[:, 0, :] += w[k] * xp[:, k:k + l_out]
    return out


if __name__ == "__main__":
    key = jax.random.PRNGKey(0)
    k_w, k_x1, k_x2, k_x3 = jax.random.split(key, 4)

    # Deterministic parameter init (same shape as nn.Conv1d(1,1,5).weight).
    bound = 1.0 / np.sqrt(1 * KERNEL)
    weight = jax.random.uniform(k_w, (1, 1, KERNEL), jnp.float32, -bound, bound)

    # Small input consistent with the module: (batch=2, channels=1, length=16) -> full-row path.
    x_small = jax.random.normal(k_x1, (2, 1, 16), jnp.float32)
    out_small = jax.block_until_ready(filter_forward(x_small, weight))
    assert out_small.shape == (2, 1, 16 + PAD), out_small.shape
    np.testing.assert_allclose(np.asarray(out_small), _reference(x_small, weight),
                               rtol=1e-5, atol=1e-4)

    # Larger input exercising the tiled (roll + halo-view + cheap-tail) path, bl = 4096.
    x_big = jax.random.normal(k_x2, (32, 1, 16384), jnp.float32)
    out_big = jax.block_until_ready(filter_forward(x_big, weight))
    assert out_big.shape == (32, 1, 16384 + PAD), out_big.shape
    np.testing.assert_allclose(np.asarray(out_big), _reference(x_big, weight),
                               rtol=1e-5, atol=1e-4)

    # Awkward length (multiple of 128 only up to 512) exercising bl=512 with larger bn.
    x_mid = jax.random.normal(k_x3, (128, 1, 2560), jnp.float32)
    out_mid = jax.block_until_ready(filter_forward(x_mid, weight))
    assert out_mid.shape == (128, 1, 2560 + PAD), out_mid.shape
    np.testing.assert_allclose(np.asarray(out_mid), _reference(x_mid, weight),
                               rtol=1e-5, atol=1e-4)

    print("KERNEL_OK")
</pallas_src>

<mosaic_0001>
module attributes {stable_mosaic.version = 11 : i64} {
  func.func @_conv1d_circ_full_kernel(%arg0: i32, %arg1: memref<5xf32, #tpu.memory_space<smem>>, %arg2: memref<2x16xf32, #tpu.memory_space<vmem>>, %arg3: memref<2x20xf32, #tpu.memory_space<vmem>>) attributes {dimension_semantics = [#tpu.dimension_semantics<parallel>], iteration_bounds = array<i64: 1>, scalar_prefetch = 0 : i64, scratch_operands = 0 : i64, tpu.core_type = #tpu.core_type<tc>, window_params = [{transform_indices = @transform_0, window_bounds = array<i64: 5>}, {transform_indices = @transform_1, window_bounds = array<i64: 2, 16>}, {transform_indices = @transform_2, window_bounds = array<i64: 2, 20>}]} {
    %c0 = arith.constant 0 : index
    %c0_0 = arith.constant 0 : index
    %0 = vector.load %arg2[%c0, %c0_0] : memref<2x16xf32, #tpu.memory_space<vmem>>, vector<2x16xf32>
    %1 = vector.extract_strided_slice %0 {offsets = [0, 12], sizes = [2, 4], strides = [1, 1]} : vector<2x16xf32> to vector<2x4xf32>
    %2 = vector.extract_strided_slice %0 {offsets = [0, 0], sizes = [2, 4], strides = [1, 1]} : vector<2x16xf32> to vector<2x4xf32>
    %3 = tpu.concatenate %1, %0, %2 in 1 : vector<2x4xf32>, vector<2x16xf32>, vector<2x4xf32> -> vector<2x24xf32>
    %c0_1 = arith.constant 0 : index
    %4 = memref.load %arg1[%c0_1] : memref<5xf32, #tpu.memory_space<smem>>
    %c1 = arith.constant 1 : index
    %5 = memref.load %arg1[%c1] : memref<5xf32, #tpu.memory_space<smem>>
    %c2 = arith.constant 2 : index
    %6 = memref.load %arg1[%c2] : memref<5xf32, #tpu.memory_space<smem>>
    %c3 = arith.constant 3 : index
    %7 = memref.load %arg1[%c3] : memref<5xf32, #tpu.memory_space<smem>>
    %c4 = arith.constant 4 : index
    %8 = memref.load %arg1[%c4] : memref<5xf32, #tpu.memory_space<smem>>
    %9 = vector.extract_strided_slice %3 {offsets = [0, 0], sizes = [2, 20], strides = [1, 1]} : vector<2x24xf32> to vector<2x20xf32>
    %10 = vector.broadcast %4 : f32 to vector<2x20xf32>
    %11 = arith.mulf %10, %9 : vector<2x20xf32>
    %12 = vector.extract_strided_slice %3 {offsets = [0, 1], sizes = [2, 20], strides = [1, 1]} : vector<2x24xf32> to vector<2x20xf32>
    %13 = vector.broadcast %5 : f32 to vector<2x20xf32>
    %14 = arith.mulf %13, %12 : vector<2x20xf32>
    %15 = arith.addf %11, %14 : vector<2x20xf32>
    %16 = vector.extract_strided_slice %3 {offsets = [0, 2], sizes = [2, 20], strides = [1, 1]} : vector<2x24xf32> to vector<2x20xf32>
    %17 = vector.broadcast %6 : f32 to vector<2x20xf32>
    %18 = arith.mulf %17, %16 : vector<2x20xf32>
    %19 = arith.addf %15, %18 : vector<2x20xf32>
    %20 = vector.extract_strided_slice %3 {offsets = [0, 3], sizes = [2, 20], strides = [1, 1]} : vector<2x24xf32> to vector<2x20xf32>
    %21 = vector.broadcast %7 : f32 to vector<2x20xf32>
    %22 = arith.mulf %21, %20 : vector<2x20xf32>
    %23 = arith.addf %19, %22 : vector<2x20xf32>
    %24 = vector.extract_strided_slice %3 {offsets = [0, 4], sizes = [2, 20], strides = [1, 1]} : vector<2x24xf32> to vector<2x20xf32>
    %25 = vector.broadcast %8 : f32 to vector<2x20xf32>
    %26 = arith.mulf %25, %24 : vector<2x20xf32>
    %27 = arith.addf %23, %26 : vector<2x20xf32>
    %c0_2 = arith.constant 0 : index
    %c0_3 = arith.constant 0 : index
    %28 = vector.load %arg3[%c0_2, %c0_3] : memref<2x20xf32, #tpu.memory_space<vmem>>, vector<2x20xf32>
    tpu.vector_store %arg3[%c0_2, %c0_3], %27 {strides = array<i32>} : memref<2x20xf32, #tpu.memory_space<vmem>>, vector<2x20xf32>,
    return
  }
  func.func @transform_0(%arg0: i32) -> i32 {
    %c0_i32 = arith.constant 0 : i32
    %c0_i32_0 = arith.constant 0 : i32
    return %c0_i32 : i32
  }
  func.func @transform_1(%arg0: i32) -> (i32, i32) {
    %c0_i32 = arith.constant 0 : i32
    %c0_i32_0 = arith.constant 0 : i32
    return %arg0, %c0_i32 : i32, i32
  }
  func.func @transform_2(%arg0: i32) -> (i32, i32) {
    %c0_i32 = arith.constant 0 : i32
    %c0_i32_0 = arith.constant 0 : i32
    return %arg0, %c0_i32 : i32, i32
  }
}

</mosaic_0001>

<llo_original>
// kernel: tpu_custom_call.1
$region0: #{tpu_custom_call.1}
  #allocation0 [shape = 'u32[]', space=smem, size = 0x4, offset = 0x4, fixed_abs, tag = 'smem constant byte address 0x4 - core index']
  #allocation1 [shape = 'u32[72,128]{1,0:T(1,128)}', space=vmem, size = 0x9000, scoped, tag = 'internal scratch']
  %s0 = inlined_call_operand.hbm [shape: f32[5], index: 0, kind: input, shape index: {}]
  %s1 = inlined_call_operand.hbm [shape: f32[2,16], index: 1, kind: input, shape index: {}]
  %s2 = inlined_call_operand.hbm [shape: f32[2,20], index: 2, kind: output, shape index: {}]
  %s3 = sld [smem:[#allocation0]]
  $region26: #{tpu_custom_call.1} parent=0
    _
  %s5 = ssub.s32 1, %s3
  %s6 = scalar_select 0, %s5, %s3
  $region1: #{tpu_custom_call.1} parent=0
    #allocation2 [shape = 'u8[512]{0}', space=smem, size = 0x200, scoped, tag = 'input window, operand 0, single buffered']
    #allocation3 [shape = 's32[1]{0}', space=sflag, size = 0x4, scoped, tag = 'scoped memory for tpu_custom_call.1']
    #allocation4 [shape = 's32[1]{0}', space=sflag, size = 0x4, scoped, tag = 'scoped memory for tpu_custom_call.1']
    #allocation5 [shape = 's32[1]{0}', space=sflag, size = 0x4, scoped, tag = 'scoped memory for tpu_custom_call.1']
    #allocation6 [shape = 'u8[1024]{0}', space=vmem, size = 0x400, scoped, tag = 'input window, operand 1, single buffered']
    #allocation7 [shape = 'u8[1024]{0}', space=vmem, size = 0x400, scoped, tag = 'output window, operand 0, single buffered']
    %7 = vsyncpa [#allocation5], 0
    %8 = vsyncpa [#allocation3], 0
    %9 = vsyncpa [#allocation4], 0
    // Predicated region
    $region2: #{tpu_custom_call.1} parent=1 // pred_check
      _
    $region3: #{tpu_custom_call.1} parent=1 // pred_check_branch
      %11 = sbr.rel (0) target = $region5
    $region4: #{tpu_custom_call.1} parent=1 // pred_region
      %13 = vsyncadd [#allocation5], 0
      %s15 = sshll.u32 %s0, 4
      %s16 = int_to_ptr.hbm [resolvable:$true] %s15
      %18 = dma.hbm_to_smem %s16, 16, [#allocation2], [#allocation5]
    $region5: #{tpu_custom_call.1} parent=1 // pred_fallthru
      _
    // Predicated region
    $region6: #{tpu_custom_call.1} parent=1 // pred_check
      _
    $region7: #{tpu_custom_call.1} parent=1 // pred_check_branch
      %20 = sbr.rel (0) target = $region9
    $region8: #{tpu_custom_call.1} parent=1 // pred_region
      %22 = vsyncadd [#allocation3], 0
      %s24 = sshll.u32 %s1, 4
      %s25 = int_to_ptr.hbm [resolvable:$true] %s24
      %s26 = sshll.u32 [#allocation6], 4
      %s27 = int_to_ptr.vmem [resolvable:$true] %s26
      %29 = dma.hbm_to_vmem [thread:$0]  %s25, 32, %s27, [#allocation3]
    $region9: #{tpu_custom_call.1} parent=1 // pred_fallthru
      _
    // Predicated region
    $region10: #{tpu_custom_call.1} parent=1 // pred_check
      _
    $region11: #{tpu_custom_call.1} parent=1 // pred_check_branch
      %31 = sbr.rel (0) target = $region13
    $region12: #{tpu_custom_call.1} parent=1 // pred_region
      %33 = dma.done [#allocation5], 16
    $region13: #{tpu_custom_call.1} parent=1 // pred_fallthru
      _
    // Predicated region
    $region14: #{tpu_custom_call.1} parent=1 // pred_check
      _
    $region15: #{tpu_custom_call.1} parent=1 // pred_check_branch
      %35 = sbr.rel (0) target = $region17
    $region16: #{tpu_custom_call.1} parent=1 // pred_region
      %37 = dma.done [#allocation3], 32
    $region17: #{tpu_custom_call.1} parent=1 // pred_fallthru
      _
    %38 = sfence
    %v39 = vld [vmem:[#allocation6] sm:$0x3]
    %41 = vrot.lane.b32.xlu0 %v39, 116
    %v42 = vpop.permute.xlu0 %41
    %44 = vrot.lane.b32.xlu0 %v39, 4
    %v45 = vpop.permute.xlu0 %44
    %47 = vrot.lane.b32.xlu0 %v39, 20
    %v48 = vpop.permute.xlu0 %47
    %vm50 = vcmask 31744
    %v51 = vsel %vm50, %v42, %v45
    %vm52 = vcmask 162816
    %v53 = vsel %vm52, %v51, %v48
    %s54 = sld [smem:[#allocation2]]
    %s55 = sld [smem:[#allocation2 + $0x1]]
    %s56 = sld [smem:[#allocation2 + $0x2]]
    %s57 = sld [smem:[#allocation2 + $0x3]]
    %s58 = sld [smem:[#allocation2 + $0x4]]
    %v59 = vstv %s54
    %v60 = vmul.f32 %v59, %v53
    %v61 = vstv %s55
    %v62 = vmul.f32 %v61, %v53
    %64 = vrot.lane.b32.xlu0 %v62, 127
    %v65 = vpop.permute.xlu0 %64
    %v67 = vadd.f32 %v60, %v65
    %v68 = vstv %s56
    %v69 = vmul.f32 %v68, %v53
    %71 = vrot.lane.b32.xlu0 %v69, 126
    %v72 = vpop.permute.xlu0 %71
    %v74 = vadd.f32 %v67, %v72
    %v75 = vstv %s57
    %v76 = vmul.f32 %v75, %v53
    %78 = vrot.lane.b32.xlu0 %v76, 125
    %v79 = vpop.permute.xlu0 %78
    %v81 = vadd.f32 %v74, %v79
    %v82 = vstv %s58
    %v83 = vmul.f32 %v82, %v53
    %85 = vrot.lane.b32.xlu0 %v83, 124
    %v86 = vpop.permute.xlu0 %85
    %v88 = vadd.f32 %v81, %v86
    %vm89 = vcmask 156672
    %90 = vst.msk [vmem:[#allocation7] sm:$0x3] %vm89, %v88
    // Predicated region
    $region18: #{tpu_custom_call.1} parent=1 // pred_check
      _
    $region19: #{tpu_custom_call.1} parent=1 // pred_check_branch
      %92 = sbr.rel (0) target = $region21
    $region20: #{tpu_custom_call.1} parent=1 // pred_region
      %94 = vsyncadd [#allocation4], 0
      %s96 = sshll.u32 [#allocation7], 4
      %s97 = int_to_ptr.vmem [resolvable:$true] %s96
      %s98 = sshll.u32 %s2, 4
      %s99 = int_to_ptr.hbm [resolvable:$true] %s98
      %101 = dma.vmem_to_hbm [thread:$0]  %s97, 32, %s99, [#allocation4]
    $region21: #{tpu_custom_call.1} parent=1 // pred_fallthru
      _
    // Predicated region
    $region22: #{tpu_custom_call.1} parent=1 // pred_check
      _
    $region23: #{tpu_custom_call.1} parent=1 // pred_check_branch
      %103 = sbr.rel (0) target = $region25
    $region24: #{tpu_custom_call.1} parent=1 // pred_region
      %105 = dma.done [#allocation4], 32
    $region25: #{tpu_custom_call.1} parent=1 // pred_fallthru
      _
    %106 = vsyncpa [#allocation3], 1
    %107 = vsyncpa [#allocation4], 1
    %108 = vsyncpa [#allocation5], 1

</llo_original>
